<compile_context>
chip_gen: v7x
topology: tpu7x:2x2x1
jax: 0.10.0
libtpu: 0.0.40
codegen_flags: <defaults>
</compile_context>

<pallas_src>
import math

import jax
import jax.numpy as jnp
from jax.experimental import pallas as pl
from jax.experimental.pallas import tpu as pltpu

HIDDEN = 240


# --------------------------------------------------------------------------- #
# Kernel
# --------------------------------------------------------------------------- #
def _fused_linear_kernel(x_ref, w_ref, o_ref):
    """One MXU matmul per batch tile: (TM, in) @ (in, out) -> (TM, out)."""
    o_ref[...] = jnp.dot(
        x_ref[...], w_ref[...], preferred_element_type=jnp.float32
    ).astype(o_ref.dtype)


# --------------------------------------------------------------------------- #
# One-time parameter prep (NOT in the per-call path)
# --------------------------------------------------------------------------- #
def fold_weights(weights):
    """Fold PyTorch-layout weights [(out, in), ...] into a single (in_features,
    out_features) matrix:  W_total = W1^T @ W2^T @ ... @ W6^T.  Done once."""
    w_total = jnp.transpose(weights[0])  # (in_features, HIDDEN)
    for w in weights[1:]:
        w_total = jnp.matmul(
            w_total, jnp.transpose(w), precision=jax.lax.Precision.HIGHEST
        )
    return w_total  # (in_features, out_features)


# --------------------------------------------------------------------------- #
# Forward wrapper
# --------------------------------------------------------------------------- #
def _round_up(a, b):
    return (a + b - 1) // b * b


def stream_net_dedi_forward(x, w_total, *, tm_max=512):
    """x: (B, in_features) f32, w_total: (in_features, out_features) f32.

    Batch is tiled with blocks of up to `tm_max` rows (grid axis marked
    "parallel" so megacore / v7x dual-TC can split it); the small folded weight
    stays VMEM-resident across the whole grid via a constant index_map.
    Batch sizes that are not a multiple of the tile are zero-padded and sliced.
    """
    B, in_f = x.shape
    out_f = w_total.shape[1]

    tm = min(tm_max, _round_up(B, 8))       # multiple of 8 (sublane rule)
    b_pad = _round_up(B, tm)
    if b_pad != B:
        x = jnp.pad(x, ((0, b_pad - B), (0, 0)))

    out = pl.pallas_call(
        _fused_linear_kernel,
        out_shape=jax.ShapeDtypeStruct((b_pad, out_f), jnp.float32),
        grid=(b_pad // tm,),
        in_specs=[
            pl.BlockSpec((tm, in_f), lambda i: (i, 0)),   # batch tile of x
            pl.BlockSpec((in_f, out_f), lambda i: (0, 0)),  # resident folded weight
        ],
        out_specs=pl.BlockSpec((tm, out_f), lambda i: (i, 0)),
        compiler_params=pltpu.CompilerParams(
            dimension_semantics=("parallel",),
        ),
    )(x, w_total)

    return out[:B] if b_pad != B else out


# --------------------------------------------------------------------------- #
# Deterministic init + pure-JAX reference (mirrors the PyTorch module)
# --------------------------------------------------------------------------- #
def init_weights(key, in_features, out_features):
    """kaiming_uniform_(a=sqrt(5)) style: U(-1/sqrt(fan_in), 1/sqrt(fan_in)),
    PyTorch (out, in) layout.  Bias is created by streamLinear but never used
    in forward, so it is omitted here."""
    dims = [(HIDDEN, in_features)] + [(HIDDEN, HIDDEN)] * 4 + [(out_features, HIDDEN)]
    keys = jax.random.split(key, len(dims))
    ws = []
    for k, (fan_out, fan_in) in zip(keys, dims):
        bound = 1.0 / math.sqrt(fan_in)
        ws.append(jax.random.uniform(k, (fan_out, fan_in), jnp.float32, -bound, bound))
    return ws


def reference_forward(x, weights):
    for w in weights:
        x = x @ w.T
    return x


# --------------------------------------------------------------------------- #
if __name__ == "__main__":
    key = jax.random.PRNGKey(0)
    k_x, k_w = jax.random.split(key)

    B, in_features, out_features = 8, 32, 16
    x = jax.random.normal(k_x, (B, in_features), jnp.float32)
    weights = init_weights(k_w, in_features, out_features)

    # One-time prep: fold the six weights into a single (in, out) matrix.
    w_total = jax.block_until_ready(fold_weights(weights))

    # Small-batch path (single grid point).
    out = jax.block_until_ready(stream_net_dedi_forward(x, w_total))
    ref = reference_forward(x, weights)
    assert out.shape == (B, out_features), out.shape
    assert jnp.allclose(out, ref, rtol=1e-4, atol=1e-4), "mismatch vs reference (B=8)"

    # Larger-batch path: exercises zero-padding + multi-tile parallel grid.
    xb = jax.random.normal(jax.random.PRNGKey(1), (700, in_features), jnp.float32)
    outb = jax.block_until_ready(stream_net_dedi_forward(xb, w_total))
    refb = reference_forward(xb, weights)
    assert outb.shape == (700, out_features), outb.shape
    assert jnp.allclose(outb, refb, rtol=1e-4, atol=1e-4), "mismatch vs reference (B=700)"

    print("KERNEL_OK")
</pallas_src>

<mosaic_0001>
module attributes {stable_mosaic.version = 11 : i64} {
  func.func @_fused_linear_kernel(%arg0: i32, %arg1: memref<8x32xf32, #tpu.memory_space<vmem>>, %arg2: memref<32x16xf32, #tpu.memory_space<vmem>>, %arg3: memref<8x16xf32, #tpu.memory_space<vmem>>) attributes {dimension_semantics = [#tpu.dimension_semantics<parallel>], iteration_bounds = array<i64: 1>, scalar_prefetch = 0 : i64, scratch_operands = 0 : i64, tpu.core_type = #tpu.core_type<tc>, window_params = [{transform_indices = @transform_0, window_bounds = array<i64: 8, 32>}, {pipeline_mode = #tpu.pipeline_mode<synchronous>, transform_indices = @transform_1, window_bounds = array<i64: 32, 16>}, {transform_indices = @transform_2, window_bounds = array<i64: 8, 16>}]} {
    %c0 = arith.constant 0 : index
    %c0_0 = arith.constant 0 : index
    %0 = vector.load %arg1[%c0, %c0_0] : memref<8x32xf32, #tpu.memory_space<vmem>>, vector<8x32xf32>
    %c0_1 = arith.constant 0 : index
    %c0_2 = arith.constant 0 : index
    %1 = vector.load %arg2[%c0_1, %c0_2] : memref<32x16xf32, #tpu.memory_space<vmem>>, vector<32x16xf32>
    %cst = arith.constant dense<0.000000e+00> : vector<8x16xf32>
    %2 = tpu.matmul %0, %1, %cst {dimension_numbers = #tpu.dot_dimension_numbers<[1], [0], [0], [1], [0, 0, 1, 1], [], []>} : vector<8x32xf32>, vector<32x16xf32>, vector<8x16xf32> -> vector<8x16xf32>
    %c0_3 = arith.constant 0 : index
    %c0_4 = arith.constant 0 : index
    %3 = vector.load %arg3[%c0_3, %c0_4] : memref<8x16xf32, #tpu.memory_space<vmem>>, vector<8x16xf32>
    tpu.vector_store %arg3[%c0_3, %c0_4], %2 {strides = array<i32>} : memref<8x16xf32, #tpu.memory_space<vmem>>, vector<8x16xf32>,
    return
  }
  func.func @transform_0(%arg0: i32) -> (i32, i32) {
    %c0_i32 = arith.constant 0 : i32
    %c0_i32_0 = arith.constant 0 : i32
    return %arg0, %c0_i32 : i32, i32
  }
  func.func @transform_1(%arg0: i32) -> (i32, i32) {
    %c0_i32 = arith.constant 0 : i32
    %c0_i32_0 = arith.constant 0 : i32
    %c0_i32_1 = arith.constant 0 : i32
    return %c0_i32, %c0_i32_0 : i32, i32
  }
  func.func @transform_2(%arg0: i32) -> (i32, i32) {
    %c0_i32 = arith.constant 0 : i32
    %c0_i32_0 = arith.constant 0 : i32
    return %arg0, %c0_i32 : i32, i32
  }
}

</mosaic_0001>

<llo_original>
// kernel: tpu_custom_call.1
$region0: #{tpu_custom_call.1}
  #allocation0 [shape = 'u32[]', space=smem, size = 0x4, offset = 0x4, fixed_abs, tag = 'smem constant byte address 0x4 - core index']
  #allocation1 [shape = 'u32[144,128]{1,0:T(1,128)}', space=vmem, size = 0x12000, scoped, tag = 'internal scratch']
  %s0 = inlined_call_operand.vmem [shape: f32[8,32], index: 0, kind: input, shape index: {}]
  %s1 = inlined_call_operand.vmem [shape: f32[32,16], index: 1, kind: input, shape index: {}]
  %s2 = inlined_call_operand.hbm [shape: f32[8,16], index: 2, kind: output, shape index: {}]
  %s3 = sld [smem:[#allocation0]]
  $region18: #{tpu_custom_call.1} parent=0
    _
  %s5 = ssub.s32 1, %s3
  %s6 = scalar_select 0, %s5, %s3
  $region1: #{tpu_custom_call.1} parent=0
    #allocation2 [shape = 'u8[4096]{0}', space=vmem, size = 0x1000, scoped, tag = 'output window, operand 0, single buffered']
    #allocation3 [shape = 's32[1]{0}', space=sflag, size = 0x4, scoped, tag = 'scoped memory for tpu_custom_call.1']
    %7 = vsyncpa [#allocation3], 0
    // Predicated region
    $region2: #{tpu_custom_call.1} parent=1 // pred_check
      _
    $region3: #{tpu_custom_call.1} parent=1 // pred_check_branch
      %9 = sbr.rel (0) target = $region5
    $region4: #{tpu_custom_call.1} parent=1 // pred_region
      _
    $region5: #{tpu_custom_call.1} parent=1 // pred_fallthru
      _
    // Predicated region
    $region6: #{tpu_custom_call.1} parent=1 // pred_check
      _
    $region7: #{tpu_custom_call.1} parent=1 // pred_check_branch
      %11 = sbr.rel (0) target = $region9
    $region8: #{tpu_custom_call.1} parent=1 // pred_region
      _
    $region9: #{tpu_custom_call.1} parent=1 // pred_fallthru
      _
    %v12 = vld [vmem:[%s0] sm:$0xff]
    %v13 = vld [vmem:[%s1] sm:$0xff]
    %v14 = vld [vmem:[%s1 + $0x8] sm:$0xff]
    %v15 = vld [vmem:[%s1 + $0x10] sm:$0xff]
    %v16 = vld [vmem:[%s1 + $0x18] sm:$0xff]
    %vm17 = vcmask 261120
    %v19 = vsel %vm17, %v12, 0
    %21 = vmatprep.subr.mxu0 0.0
    %22 = vmatpush1.msra.mxu0 %v13
    %23 = vmatprep.subr.mxu0 0.0
    %24 = vmatpush1.msra.mxu0 %v14
    %25 = vmatprep.subr.mxu0 0.0
    %26 = vmatpush1.msra.mxu0 %v15
    %27 = vmatprep.subr.mxu0 0.0
    %28 = vmatpush1.msra.mxu0 %v16
    %29 = vmatprep.subr.mxu0 0.0
    %30 = vmatpush1.msra.mxu0 0.0
    %31 = vmatprep.subr.mxu0 0.0
    %32 = vmatpush1.msra.mxu0 0.0
    %33 = vmatprep.subr.mxu0 0.0
    %34 = vmatpush1.msra.mxu0 0.0
    %35 = vmatprep.subr.mxu0 0.0
    %36 = vmatpush1.msra.mxu0 0.0
    %37 = vmatprep.subr.mxu0 0.0
    %38 = vmatpush1.msra.mxu0 0.0
    %39 = vmatprep.subr.mxu0 0.0
    %40 = vmatpush1.msra.mxu0 0.0
    %41 = vmatprep.subr.mxu0 0.0
    %42 = vmatpush1.msra.mxu0 0.0
    %43 = vmatprep.subr.mxu0 0.0
    %44 = vmatpush1.msra.mxu0 0.0
    %45 = vmatprep.subr.mxu0 0.0
    %46 = vmatpush1.msra.mxu0 0.0
    %47 = vmatprep.subr.mxu0 0.0
    %48 = vmatpush1.msra.mxu0 0.0
    %49 = vmatprep.subr.mxu0 0.0
    %50 = vmatpush1.msra.mxu0 0.0
    %51 = vmatprep.subr.mxu0 0.0
    %52 = vmatpush1.msra.mxu0 0.0
    %53 = vmatprep.subr.mxu0 0.0
    %54 = vmatpush1.msra.mxu0 0.0
    %55 = vmatprep.subr.mxu0 0.0
    %56 = vmatpush1.msra.mxu0 0.0
    %57 = vmatprep.subr.mxu0 0.0
    %58 = vmatpush1.msra.mxu0 0.0
    %59 = vmatprep.subr.mxu0 0.0
    %60 = vmatpush1.msra.mxu0 0.0
    %61 = vmatprep.subr.mxu0 0.0
    %62 = vmatpush1.msra.mxu0 0.0
    %63 = vmatprep.subr.mxu0 0.0
    %64 = vmatpush1.msra.mxu0 0.0
    %65 = vmatprep.subr.mxu0 0.0
    %66 = vmatpush1.msra.mxu0 0.0
    %67 = vmatprep.subr.mxu0 0.0
    %68 = vmatpush1.msra.mxu0 0.0
    %69 = vmatprep.subr.mxu0 0.0
    %70 = vmatpush1.msra.mxu0 0.0
    %71 = vmatprep.subr.mxu0 0.0
    %72 = vmatpush1.msra.mxu0 0.0
    %73 = vmatprep.subr.mxu0 0.0
    %74 = vmatpush1.msra.mxu0 0.0
    %75 = vmatprep.subr.mxu0 0.0
    %76 = vmatpush1.msra.mxu0 0.0
    %77 = vmatprep.subr.mxu0 0.0
    %78 = vmatpush1.msra.mxu0 0.0
    %79 = vmatprep.subr.mxu0 0.0
    %80 = vmatpush1.msra.mxu0 0.0
    %81 = vmatprep.subr.mxu0 0.0
    %82 = vmatpush1.msra.mxu0 0.0
    %83 = vmatprep.subr.mxu0 0.0
    %84 = vmatpush1.msra.mxu0 0.0
    %85 = vmatprep.mubr.f32.mxu0 0.0
    %86 = vmatmul.mubr.f32.gmra.mrb[0].mxu0 %v19
    %v87 = vpop.f32.mrb[0].mxu0
    %v88 = vadd.f32 0.0, %v87
    %v89 = vpop.f32.mrb[0].mxu0
    %90 = vdwg.mxu0
    %vm91 = vcmask 130048
    %92 = vst.msk [vmem:[#allocation2] sm:$0xff] %vm91, %v88
    // Predicated region
    $region10: #{tpu_custom_call.1} parent=1 // pred_check
      _
    $region11: #{tpu_custom_call.1} parent=1 // pred_check_branch
      %94 = sbr.rel (0) target = $region13
    $region12: #{tpu_custom_call.1} parent=1 // pred_region
      %s96 = ssub.s32 128, 128
      %97 = vsyncadd [#allocation3], %s96
      %s99 = sshll.u32 [#allocation2], 4
      %s100 = int_to_ptr.vmem [resolvable:$true] %s99
      %102 = dma.vmem_to_hbm [thread:$0]  %s100, 128, %s2, [#allocation3]
    $region13: #{tpu_custom_call.1} parent=1 // pred_fallthru
      _
    // Predicated region
    $region14: #{tpu_custom_call.1} parent=1 // pred_check
      _
    $region15: #{tpu_custom_call.1} parent=1 // pred_check_branch
      %104 = sbr.rel (0) target = $region17
    $region16: #{tpu_custom_call.1} parent=1 // pred_region
      %105 = dma.done [#allocation3], 128
    $region17: #{tpu_custom_call.1} parent=1 // pred_fallthru
      _
    %106 = vsyncpa [#allocation3], 1

</llo_original>
